<compile_context>
chip_gen: v7x
topology: tpu7x:2x2x1
jax: 0.10.0
libtpu: 0.0.40
codegen_flags: <defaults>
</compile_context>

<pallas_src>
import functools
import math

import jax
import jax.numpy as jnp
from jax.experimental import pallas as pl
from jax.experimental.pallas import tpu as pltpu


_MAX_TM = 4096      # row-tile upper cap (the VMEM budget may lower it)
_MAX_TN = 2048      # column-tile cap (multiple of 128); full N is used if smaller


def _round_up(x, m):
    return (x + m - 1) // m * m


@functools.lru_cache(maxsize=None)
def _physical_vmem_bytes():
    """Per-TensorCore VMEM capacity; falls back to the smallest gen (v7x, 64 MiB)."""
    try:
        vmem = int(pltpu.get_tpu_info().vmem_capacity_bytes)
        if vmem > 0:
            return vmem
    except Exception:
        pass
    return 64 * 1024 * 1024


def _linear_kernel(x_ref, w_ref, b_ref, o_ref):
    # x_ref: (tm, K)   w_ref: (K, tn)   b_ref: (1, tn) f32   o_ref: (tm, tn)
    acc = jnp.dot(x_ref[...], w_ref[...], preferred_element_type=jnp.float32)
    # f32 bias epilogue (works on v5e's f32-only VPU), single cast at the store.
    o_ref[...] = (acc + b_ref[...]).astype(o_ref.dtype)


def prepare_embedding_params(weight, bias):
    """One-time parameter prep, hoisted out of the per-forward path.

    weight: (embedding_dim, node_dim)  -- torch nn.Linear layout
    bias:   (embedding_dim,)
    returns (w_t, b_row) = ((node_dim, embedding_dim), (1, embedding_dim) float32)
    """
    w_t = jnp.asarray(weight).T
    b_row = jnp.asarray(bias).reshape(1, -1).astype(jnp.float32)
    return w_t, b_row


@functools.partial(jax.jit, static_argnames=("out_dtype",))
def embedding_net_forward(x, w_t, b_row, *, out_dtype=None):
    """EmbeddingNet forward: x @ W^T + b over the last axis.

    x:      (..., node_dim)
    w_t:    (node_dim, embedding_dim)    from prepare_embedding_params
    b_row:  (1, embedding_dim) float32   from prepare_embedding_params
    out_dtype: output dtype (default x.dtype). jnp.bfloat16 halves the dominant
        HBM writeback; accumulation and the bias epilogue stay f32 either way.
    """
    *lead, K = x.shape
    Kw, N = w_t.shape
    assert Kw == K, "weight/input node_dim mismatch"
    if out_dtype is None:
        out_dtype = x.dtype
    M = math.prod(lead) if lead else 1
    x2d = x.reshape(M, K)

    # ---- tile selection ------------------------------------------------------
    # N: one tile covering the whole feature dim whenever it fits (<= _MAX_TN);
    # weight/bias block indices are then constant -> DMA'd once, grid is 1-D.
    tn = N if N <= _MAX_TN else _MAX_TN            # _MAX_TN is a multiple of 128
    n_blocks = pl.cdiv(N, tn)

    # M: biggest row tile that keeps the double-buffered tiles inside a
    # per-generation VMEM budget. With K=4 the x/W/bias tiles are tiny; the
    # output tile dominates the footprint.
    itemsize_x = x2d.dtype.itemsize
    itemsize_o = jnp.dtype(out_dtype).itemsize
    kp = _round_up(K, 128)                         # lane padding of the K axis
    tnp = _round_up(tn, 128)                       # lane padding of the N axis
    phys_vmem = _physical_vmem_bytes()
    tile_budget = phys_vmem // 2                   # 32 MiB (v7x) / 64 MiB (v5e,v6e)
    vmem_limit = min(phys_vmem * 3 // 4, 100 * 1024 * 1024)
    # VMEM bytes that do not scale with tm (double-buffered W^T + 8-sublane bias).
    fixed = 2 * (_round_up(K, 8) * tnp * w_t.dtype.itemsize + 8 * tnp * 4)
    per_row = kp * itemsize_x + tnp * itemsize_o   # x row + out row, per buffer
    tm_cap = max(16, (tile_budget - fixed) // (2 * per_row))
    tm = min(_MAX_TM, tm_cap, _round_up(M, 16))
    tm = max(16, (tm // 16) * 16)                  # sublane / bf16-packing friendly
    m_blocks = pl.cdiv(M, tm)

    # v7x shards "parallel" grid axes over its 2 TensorCores: avoid a 1-program
    # grid when M is big enough to split into two >=16-row tiles.
    if m_blocks * n_blocks == 1 and M >= 32:
        tm = max(16, _round_up(pl.cdiv(M, 2), 16))
        m_blocks = pl.cdiv(M, tm)

    # ---- grid / specs --------------------------------------------------------
    if n_blocks == 1:
        grid = (m_blocks,)
        in_specs = [
            pl.BlockSpec((tm, K), lambda i: (i, 0)),   # x row tile (streamed)
            pl.BlockSpec((K, tn), lambda i: (0, 0)),   # whole W^T (resident)
            pl.BlockSpec((1, tn), lambda i: (0, 0)),   # whole bias (resident)
        ]
        out_specs = pl.BlockSpec((tm, tn), lambda i: (i, 0))
        dim_sem = ("parallel",)
    else:
        grid = (m_blocks, n_blocks)
        in_specs = [
            pl.BlockSpec((tm, K), lambda i, j: (i, 0)),
            pl.BlockSpec((K, tn), lambda i, j: (0, j)),
            pl.BlockSpec((1, tn), lambda i, j: (0, j)),
        ]
        out_specs = pl.BlockSpec((tm, tn), lambda i, j: (i, j))
        dim_sem = ("parallel", "parallel")

    # Scheduler hint: HBM-bound streaming op (~2 flop/byte at K=4).
    cost = pl.CostEstimate(
        flops=2 * M * K * N,
        transcendentals=0,
        bytes_accessed=(x2d.size * itemsize_x
                        + w_t.size * w_t.dtype.itemsize
                        + b_row.size * 4
                        + M * N * itemsize_o),
    )

    out2d = pl.pallas_call(
        _linear_kernel,
        out_shape=jax.ShapeDtypeStruct((M, N), out_dtype),
        grid_spec=pl.GridSpec(grid=grid, in_specs=in_specs, out_specs=out_specs),
        compiler_params=pltpu.CompilerParams(
            dimension_semantics=dim_sem,
            vmem_limit_bytes=int(vmem_limit),
        ),
        cost_estimate=cost,
    )(x2d, w_t, b_row)

    return out2d.reshape(*lead, N)


def init_embedding_net_params(key, node_dim, embedding_dim, dtype=jnp.float32):
    """Deterministic init mimicking nn.Linear default (U(-1/sqrt(in), 1/sqrt(in)))."""
    k_w, k_b = jax.random.split(key)
    bound = 1.0 / (node_dim ** 0.5)
    weight = jax.random.uniform(
        k_w, (embedding_dim, node_dim), dtype=dtype, minval=-bound, maxval=bound
    )
    bias = jax.random.uniform(
        k_b, (embedding_dim,), dtype=dtype, minval=-bound, maxval=bound
    )
    return weight, bias


if __name__ == "__main__":
    key = jax.random.PRNGKey(0)
    k_x, k_p = jax.random.split(key)

    B, S = 2, 8            # batch of 2 problems, 8 nodes each
    node_dim = 4           # node feature dim (e.g. coords + objectives)
    embedding_dim = 32

    x = jax.random.normal(k_x, (B, S, node_dim), dtype=jnp.float32)
    weight, bias = init_embedding_net_params(k_p, node_dim, embedding_dim)

    # One-time parameter prep (hoisted out of the per-forward path).
    w_t, b_row = prepare_embedding_params(weight, bias)

    # f32 path (matches nn.Linear math).
    out = embedding_net_forward(x, w_t, b_row)
    out = jax.block_until_ready(out)

    ref = x @ weight.T + bias
    assert out.shape == (B, S, embedding_dim)
    assert jnp.allclose(out, ref, atol=1e-5, rtol=1e-5)

    # Optional bf16 output: halves the dominant HBM writeback (f32 accumulate).
    out_bf16 = embedding_net_forward(x, w_t, b_row, out_dtype=jnp.bfloat16)
    out_bf16 = jax.block_until_ready(out_bf16)
    assert out_bf16.shape == (B, S, embedding_dim)
    assert jnp.allclose(out_bf16.astype(jnp.float32), ref, atol=5e-2, rtol=5e-2)

    print("KERNEL_OK")
</pallas_src>

<mosaic_0001>
module attributes {stable_mosaic.version = 11 : i64} {
  func.func @_linear_kernel(%arg0: i32, %arg1: memref<16x4xf32, #tpu.memory_space<vmem>>, %arg2: memref<4x32xf32, #tpu.memory_space<vmem>>, %arg3: memref<1x32xf32, #tpu.memory_space<vmem>>, %arg4: memref<16x32xf32, #tpu.memory_space<vmem>>) attributes {dimension_semantics = [#tpu.dimension_semantics<parallel>], iteration_bounds = array<i64: 1>, scalar_prefetch = 0 : i64, scratch_operands = 0 : i64, tpu.core_type = #tpu.core_type<tc>, window_params = [{transform_indices = @transform_0, window_bounds = array<i64: 16, 4>}, {pipeline_mode = #tpu.pipeline_mode<synchronous>, transform_indices = @transform_1, window_bounds = array<i64: 4, 32>}, {pipeline_mode = #tpu.pipeline_mode<synchronous>, transform_indices = @transform_2, window_bounds = array<i64: 1, 32>}, {transform_indices = @transform_3, window_bounds = array<i64: 16, 32>}]} {
    %c0 = arith.constant 0 : index
    %c0_0 = arith.constant 0 : index
    %0 = vector.load %arg1[%c0, %c0_0] : memref<16x4xf32, #tpu.memory_space<vmem>>, vector<16x4xf32>
    %c0_1 = arith.constant 0 : index
    %c0_2 = arith.constant 0 : index
    %1 = vector.load %arg2[%c0_1, %c0_2] : memref<4x32xf32, #tpu.memory_space<vmem>>, vector<4x32xf32>
    %cst = arith.constant dense<0.000000e+00> : vector<16x32xf32>
    %2 = tpu.matmul %0, %1, %cst {dimension_numbers = #tpu.dot_dimension_numbers<[1], [0], [0], [1], [0, 0, 1, 1], [], []>} : vector<16x4xf32>, vector<4x32xf32>, vector<16x32xf32> -> vector<16x32xf32>
    %c0_3 = arith.constant 0 : index
    %c0_4 = arith.constant 0 : index
    %3 = vector.load %arg3[%c0_3, %c0_4] : memref<1x32xf32, #tpu.memory_space<vmem>>, vector<1x32xf32>
    %4 = vector.broadcast %3 : vector<1x32xf32> to vector<16x32xf32>
    %5 = arith.addf %2, %4 : vector<16x32xf32>
    %c0_5 = arith.constant 0 : index
    %c0_6 = arith.constant 0 : index
    %6 = vector.load %arg4[%c0_5, %c0_6] : memref<16x32xf32, #tpu.memory_space<vmem>>, vector<16x32xf32>
    tpu.vector_store %arg4[%c0_5, %c0_6], %5 {strides = array<i32>} : memref<16x32xf32, #tpu.memory_space<vmem>>, vector<16x32xf32>,
    return
  }
  func.func @transform_0(%arg0: i32) -> (i32, i32) {
    %c0_i32 = arith.constant 0 : i32
    %c0_i32_0 = arith.constant 0 : i32
    return %arg0, %c0_i32 : i32, i32
  }
  func.func @transform_1(%arg0: i32) -> (i32, i32) {
    %c0_i32 = arith.constant 0 : i32
    %c0_i32_0 = arith.constant 0 : i32
    %c0_i32_1 = arith.constant 0 : i32
    return %c0_i32, %c0_i32_0 : i32, i32
  }
  func.func @transform_2(%arg0: i32) -> (i32, i32) {
    %c0_i32 = arith.constant 0 : i32
    %c0_i32_0 = arith.constant 0 : i32
    %c0_i32_1 = arith.constant 0 : i32
    return %c0_i32, %c0_i32_0 : i32, i32
  }
  func.func @transform_3(%arg0: i32) -> (i32, i32) {
    %c0_i32 = arith.constant 0 : i32
    %c0_i32_0 = arith.constant 0 : i32
    return %arg0, %c0_i32 : i32, i32
  }
}

</mosaic_0001>

<llo_original>
// kernel: embedding_net_forward.1
$region0: #{embedding_net_forward.1}
  #allocation0 [shape = 'u32[]', space=smem, size = 0x4, offset = 0x4, fixed_abs, tag = 'smem constant byte address 0x4 - core index']
  #allocation1 [shape = 'u32[144,128]{1,0:T(1,128)}', space=vmem, size = 0x12000, scoped, tag = 'internal scratch']
  %s0 = inlined_call_operand.vmem [shape: f32[16,4], index: 0, kind: input, shape index: {}]
  %s1 = inlined_call_operand.vmem [shape: f32[4,32], index: 1, kind: input, shape index: {}]
  %s2 = inlined_call_operand.vmem [shape: f32[1,32], index: 2, kind: input, shape index: {}]
  %s3 = inlined_call_operand.hbm [shape: f32[16,32], index: 3, kind: output, shape index: {}]
  %s4 = sld [smem:[#allocation0]]
  $region22: #{embedding_net_forward.1} parent=0
    _
  %s6 = ssub.s32 1, %s4
  %s7 = scalar_select 0, %s6, %s4
  $region1: #{embedding_net_forward.1} parent=0
    #allocation2 [shape = 'u8[8192]{0}', space=vmem, size = 0x2000, scoped, tag = 'output window, operand 0, single buffered']
    #allocation3 [shape = 's32[1]{0}', space=sflag, size = 0x4, scoped, tag = 'scoped memory for embedding_net_forward.1']
    %8 = vsyncpa [#allocation3], 0
    // Predicated region
    $region2: #{embedding_net_forward.1} parent=1 // pred_check
      _
    $region3: #{embedding_net_forward.1} parent=1 // pred_check_branch
      %10 = sbr.rel (0) target = $region5
    $region4: #{embedding_net_forward.1} parent=1 // pred_region
      _
    $region5: #{embedding_net_forward.1} parent=1 // pred_fallthru
      _
    // Predicated region
    $region6: #{embedding_net_forward.1} parent=1 // pred_check
      _
    $region7: #{embedding_net_forward.1} parent=1 // pred_check_branch
      %12 = sbr.rel (0) target = $region9
    $region8: #{embedding_net_forward.1} parent=1 // pred_region
      _
    $region9: #{embedding_net_forward.1} parent=1 // pred_fallthru
      _
    // Predicated region
    $region10: #{embedding_net_forward.1} parent=1 // pred_check
      _
    $region11: #{embedding_net_forward.1} parent=1 // pred_check_branch
      %14 = sbr.rel (0) target = $region13
    $region12: #{embedding_net_forward.1} parent=1 // pred_region
      _
    $region13: #{embedding_net_forward.1} parent=1 // pred_fallthru
      _
    %v15 = vld [vmem:[%s0] sm:$0xff]
    %v16 = vld [vmem:[%s0 + $0x8] sm:$0xff]
    %v17 = vld [vmem:[%s1] sm:$0xf]
    %v18 = vld [vmem:[%s2] sm:$0x1]
    %v20 = vlaneseq
    %v21 = vshrl.u32 %v20, 7
    %v22 = vsub.s32 0, %v21
    %v23 = vrot.slane %v18, %v22
    %vm25 = vcmask 31744
    %v27 = vsel %vm25, %v15, 0
    %v30 = vsel %vm25, %v16, 0
    %vm32 = vcmask 1043456
    %v34 = vsel %vm32, %v17, 0
    %36 = vmatprep.subr.mxu0 0.0
    %37 = vmatpush1.msra.mxu0 %v34
    %38 = vmatprep.subr.mxu0 0.0
    %39 = vmatpush1.msra.mxu0 0.0
    %40 = vmatprep.subr.mxu0 0.0
    %41 = vmatpush1.msra.mxu0 0.0
    %42 = vmatprep.subr.mxu0 0.0
    %43 = vmatpush1.msra.mxu0 0.0
    %44 = vmatprep.subr.mxu0 0.0
    %45 = vmatpush1.msra.mxu0 0.0
    %46 = vmatprep.subr.mxu0 0.0
    %47 = vmatpush1.msra.mxu0 0.0
    %48 = vmatprep.subr.mxu0 0.0
    %49 = vmatpush1.msra.mxu0 0.0
    %50 = vmatprep.subr.mxu0 0.0
    %51 = vmatpush1.msra.mxu0 0.0
    %52 = vmatprep.subr.mxu0 0.0
    %53 = vmatpush1.msra.mxu0 0.0
    %54 = vmatprep.subr.mxu0 0.0
    %55 = vmatpush1.msra.mxu0 0.0
    %56 = vmatprep.subr.mxu0 0.0
    %57 = vmatpush1.msra.mxu0 0.0
    %58 = vmatprep.subr.mxu0 0.0
    %59 = vmatpush1.msra.mxu0 0.0
    %60 = vmatprep.subr.mxu0 0.0
    %61 = vmatpush1.msra.mxu0 0.0
    %62 = vmatprep.subr.mxu0 0.0
    %63 = vmatpush1.msra.mxu0 0.0
    %64 = vmatprep.subr.mxu0 0.0
    %65 = vmatpush1.msra.mxu0 0.0
    %66 = vmatprep.subr.mxu0 0.0
    %67 = vmatpush1.msra.mxu0 0.0
    %68 = vmatprep.subr.mxu0 0.0
    %69 = vmatpush1.msra.mxu0 0.0
    %70 = vmatprep.subr.mxu0 0.0
    %71 = vmatpush1.msra.mxu0 0.0
    %72 = vmatprep.subr.mxu0 0.0
    %73 = vmatpush1.msra.mxu0 0.0
    %74 = vmatprep.subr.mxu0 0.0
    %75 = vmatpush1.msra.mxu0 0.0
    %76 = vmatprep.subr.mxu0 0.0
    %77 = vmatpush1.msra.mxu0 0.0
    %78 = vmatprep.subr.mxu0 0.0
    %79 = vmatpush1.msra.mxu0 0.0
    %80 = vmatprep.subr.mxu0 0.0
    %81 = vmatpush1.msra.mxu0 0.0
    %82 = vmatprep.subr.mxu0 0.0
    %83 = vmatpush1.msra.mxu0 0.0
    %84 = vmatprep.subr.mxu0 0.0
    %85 = vmatpush1.msra.mxu0 0.0
    %86 = vmatprep.subr.mxu0 0.0
    %87 = vmatpush1.msra.mxu0 0.0
    %88 = vmatprep.subr.mxu0 0.0
    %89 = vmatpush1.msra.mxu0 0.0
    %90 = vmatprep.subr.mxu0 0.0
    %91 = vmatpush1.msra.mxu0 0.0
    %92 = vmatprep.subr.mxu0 0.0
    %93 = vmatpush1.msra.mxu0 0.0
    %94 = vmatprep.subr.mxu0 0.0
    %95 = vmatpush1.msra.mxu0 0.0
    %96 = vmatprep.subr.mxu0 0.0
    %97 = vmatpush1.msra.mxu0 0.0
    %98 = vmatprep.subr.mxu0 0.0
    %99 = vmatpush1.msra.mxu0 0.0
    %100 = vmatprep.mubr.f32.mxu0 0.0
    %101 = vmatmul.mubr.f32.gmra.mrb[0].mxu0 %v27
    %v102 = vpop.f32.mrb[0].mxu0
    %v103 = vadd.f32 %v23, %v102
    %v104 = vpop.f32.mrb[0].mxu0
    %105 = vmatprep.mubr.f32.mxu0 0.0
    %106 = vmatmul.mubr.f32.gmra.mrb[0].mxu0 %v30
    %v107 = vpop.f32.mrb[0].mxu0
    %v108 = vadd.f32 %v23, %v107
    %v109 = vpop.f32.mrb[0].mxu0
    %110 = vdwg.mxu0
    %vm111 = vcmask 261120
    %112 = vst.msk [vmem:[#allocation2] sm:$0xff] %vm111, %v103
    %113 = vst.msk [vmem:[#allocation2 + $0x8] sm:$0xff] %vm111, %v108
    // Predicated region
    $region14: #{embedding_net_forward.1} parent=1 // pred_check
      _
    $region15: #{embedding_net_forward.1} parent=1 // pred_check_branch
      %115 = sbr.rel (0) target = $region17
    $region16: #{embedding_net_forward.1} parent=1 // pred_region
      %s117 = ssub.s32 256, 256
      %118 = vsyncadd [#allocation3], %s117
      %s119 = sshll.u32 [#allocation2], 4
      %s120 = int_to_ptr.vmem [resolvable:$true] %s119
      %125 = dma.vmem_to_hbm [thread:$0]  %s120, 256, %s3, [#allocation3], 128, 128, 8
    $region17: #{embedding_net_forward.1} parent=1 // pred_fallthru
      _
    // Predicated region
    $region18: #{embedding_net_forward.1} parent=1 // pred_check
      _
    $region19: #{embedding_net_forward.1} parent=1 // pred_check_branch
      %127 = sbr.rel (0) target = $region21
    $region20: #{embedding_net_forward.1} parent=1 // pred_region
      %128 = dma.done [#allocation3], 256
    $region21: #{embedding_net_forward.1} parent=1 // pred_fallthru
      _
    %129 = vsyncpa [#allocation3], 1

</llo_original>
